<compile_context>
chip_gen: v6e
topology: v6e:2x2x1
jax: 0.10.0
libtpu: 0.0.40
codegen_flags: <defaults>
</compile_context>

<pallas_src>
import functools

import jax
import jax.numpy as jnp
from jax.experimental import pallas as pl
from jax.experimental.pallas import tpu as pltpu


def _add_layernorm_kernel(r_ref, a_ref, g_ref, b_ref, o_ref, *, eps, d_model,
                          d_pad):
    """Fused residual add + LayerNorm over the last axis, f32 math."""
    x = r_ref[...].astype(jnp.float32) + a_ref[...].astype(jnp.float32)
    inv_n = jnp.float32(1.0 / d_model)
    # Two-pass statistics: mean, then variance of the centered values.  The
    # one-pass E[x^2]-E[x]^2 form cancels catastrophically when |mean| >> std
    # (common for residual streams); the extra reduction is free here because
    # the kernel is HBM-bound with large VPU/XLU slack.
    mean = jnp.sum(x, axis=-1, keepdims=True) * inv_n
    centered = x - mean
    if d_pad != d_model:
        # Zero-padded lanes contribute 0 to sum(x) (r and a are zero-padded in
        # the wrapper), so the mean above is already correct; only the squared
        # term needs masking.
        lane = jax.lax.broadcasted_iota(jnp.int32, x.shape, x.ndim - 1)
        centered = jnp.where(lane < d_model, centered, 0.0)
    var = jnp.sum(centered * centered, axis=-1, keepdims=True) * inv_n
    inv = jax.lax.rsqrt(var + jnp.float32(eps))
    y = centered * inv * g_ref[...].astype(jnp.float32) \
        + b_ref[...].astype(jnp.float32)
    o_ref[...] = y.astype(o_ref.dtype)


def _vmem_capacity_bytes():
    try:
        return int(pltpu.get_tpu_info().vmem_capacity_bytes)
    except Exception:
        # Conservative fallback (v7x-sized) that is safe on every generation.
        return 64 << 20


def _per_row_vmem_bytes(d_pad, itemsize):
    # (2 inputs + 1 output) x double-buffered pipeline at the I/O dtype, plus
    # ~3 full-tile f32 temporaries (x, centered, y / compiler retiling temp).
    return 3 * 2 * d_pad * itemsize + 3 * d_pad * 4


def _pick_row_tile(rows, d_pad, itemsize, vmem_bytes):
    """Largest row tile that fits comfortably in scoped VMEM (capped at 512)."""
    per_row = _per_row_vmem_bytes(d_pad, itemsize)
    # Smaller budget fraction on small-VMEM chips (v7x: 64 MiB/TC) to leave
    # headroom for Mosaic internal scratch and the resident gamma/beta tiles.
    budget_frac = 0.4 if vmem_bytes <= (80 << 20) else 0.5
    budget = int(vmem_bytes * budget_frac)
    tile = budget // max(per_row, 1)
    # 512 rows already reaches ~85% of the HBM roofline; larger tiles only
    # waste VMEM (measured: 1024 rows -> ~86%).
    tile = min(tile, 512)

    # Dtype-aware minimum so bf16/int8 sublane packing stays full-vreg.
    min_tile = {4: 8, 2: 16, 1: 32}.get(itemsize, 8)

    if tile >= rows:
        # A single block would cover everything.  v7x has 2 TensorCores per
        # chip, so when there is enough work split into >= 2 grid steps so the
        # second core is not idle; the extra ~0.35 us/step is noise on
        # single-TC v5e/v6e.
        if rows >= 64:
            half = pl.cdiv(rows, 2)
            return max(32, (half // 32) * 32)
        return rows  # tiny problem: one full-extent block (always legal).

    if tile >= 32:
        # Keep the sublane dim a multiple of 32 so packed layouts stay full
        # (and >= 8 for the f32 (8,128) rule).
        tile = (tile // 32) * 32
    else:
        tile = min_tile
        # TODO(synk): if even min_tile * per_row exceeds the VMEM budget
        # (astronomically large d_model), split d_model into lane chunks with
        # a two-pass accumulator scheme instead of shrinking rows further.
    return tile


def _block_spec(shape, index_map, buffer_count=None):
    """BlockSpec with optional pipeline depth; falls back if unsupported."""
    if buffer_count is None or not hasattr(pl, "Buffered"):
        return pl.BlockSpec(shape, index_map)
    try:
        return pl.BlockSpec(shape, index_map,
                            pipeline_mode=pl.Buffered(buffer_count))
    except Exception:
        return pl.BlockSpec(shape, index_map)


def add_and_normalization(r, a, gamma, beta, *, eps=1e-6,
                          donate_residual=False):
    """out = LayerNorm(r + a) with affine params gamma/beta over the last dim."""
    assert r.shape == a.shape
    orig_shape = r.shape
    d_model = orig_shape[-1]
    rows = 1
    for s in orig_shape[:-1]:
        rows *= s

    # Pad the lane (feature) axis to a multiple of 128 so output stores inside
    # the kernel are lane-dense (unmasked vst) rather than masked partial
    # stores -- the biggest single store-path lever.  Real transformer widths
    # are already multiples of 128, so this only triggers for odd d_model.
    d_pad = ((d_model + 127) // 128) * 128

    r2 = r.reshape(rows, d_model)
    a2 = a.reshape(rows, d_model)
    g2 = gamma.reshape(1, d_model)
    b2 = beta.reshape(1, d_model)
    if d_pad != d_model:
        pad = ((0, 0), (0, d_pad - d_model))
        r2 = jnp.pad(r2, pad)
        a2 = jnp.pad(a2, pad)
        g2 = jnp.pad(g2, pad)
        b2 = jnp.pad(b2, pad)

    itemsize = jnp.dtype(r.dtype).itemsize
    vmem_cap = _vmem_capacity_bytes()
    tile = _pick_row_tile(rows, d_pad, itemsize, vmem_cap)

    # Ragged last block is fine: per-row LayerNorm on padded rows is computed
    # on don't-care data and masked out on the write-back.
    grid = (pl.cdiv(rows, tile),)

    # Explicit scoped-VMEM limit (v5e's scoped default is only 16 MiB), sized
    # from the same per-row accounting used to pick the tile, and kept well
    # under physical capacity on small-VMEM chips (v7x: 64 MiB).
    per_row = _per_row_vmem_bytes(d_pad, itemsize)
    need = per_row * tile + 4 * d_pad * 4  # + double-buffered gamma/beta
    ceiling_frac = 0.7 if vmem_cap <= (80 << 20) else 0.9
    vmem_limit = min(int(vmem_cap * ceiling_frac),
                     max(32 << 20, int(need * 1.5)))
    vmem_limit = max(vmem_limit, need)

    # Small row tiles (huge d_model) expose per-step DMA latency: use a 3-deep
    # pipeline for the streamed inputs when there are enough grid steps for it
    # to matter.  gamma/beta keep the default double buffer -- the waste is
    # only ~2*d_pad*4 B each, negligible next to the multi-MiB row tiles.
    io_buffers = 3 if (tile < 128 and grid[0] >= 4) else None

    kernel = functools.partial(_add_layernorm_kernel, eps=eps,
                               d_model=d_model, d_pad=d_pad)

    out2 = pl.pallas_call(
        kernel,
        out_shape=jax.ShapeDtypeStruct((rows, d_pad), r.dtype),
        grid_spec=pltpu.PrefetchScalarGridSpec(
            num_scalar_prefetch=0,
            grid=grid,
            in_specs=[
                _block_spec((tile, d_pad), lambda i: (i, 0), io_buffers),
                _block_spec((tile, d_pad), lambda i: (i, 0), io_buffers),
                # gamma/beta: constant index map -> resident across the grid.
                pl.BlockSpec((1, d_pad), lambda i: (0, 0)),
                pl.BlockSpec((1, d_pad), lambda i: (0, 0)),
            ],
            out_specs=pl.BlockSpec((tile, d_pad), lambda i: (i, 0)),
        ),
        compiler_params=pltpu.CompilerParams(
            # "parallel" lets the row axis be sharded across TensorCores on
            # megacore / v7x; _pick_row_tile guarantees >= 2 grid steps when
            # rows >= 64 so the second core is not left idle.
            dimension_semantics=("parallel",),
            vmem_limit_bytes=vmem_limit,
        ),
        # Minor footprint/scheduling win when the caller can donate r (same
        # shape/dtype, identical block index maps).  Off by default.
        input_output_aliases=({0: 0} if donate_residual else {}),
    )(r2, a2, g2, b2)

    if d_pad != d_model:
        out2 = out2[:, :d_model]
    return out2.reshape(orig_shape)


def _reference(r, a, gamma, beta, eps=1e-6):
    x = (r + a).astype(jnp.float32)
    mean = jnp.mean(x, axis=-1, keepdims=True)
    var = jnp.mean((x - mean) ** 2, axis=-1, keepdims=True)
    y = (x - mean) * jax.lax.rsqrt(var + eps)
    return (y * gamma + beta).astype(r.dtype)


if __name__ == "__main__":
    batch, seq, d_model = 2, 8, 32
    key = jax.random.PRNGKey(0)
    kr, ka = jax.random.split(key)

    r = jax.random.normal(kr, (batch, seq, d_model), dtype=jnp.float32)
    a = jax.random.normal(ka, (batch, seq, d_model), dtype=jnp.float32)

    # nn.LayerNorm(d_model) default init: weight = ones, bias = zeros.
    gamma = jnp.ones((d_model,), dtype=jnp.float32)
    beta = jnp.zeros((d_model,), dtype=jnp.float32)

    # Module spec uses epsilon=1e-06 (NOT torch's 1e-5 default).
    out = add_and_normalization(r, a, gamma, beta, eps=1e-6)
    out = jax.block_until_ready(out)

    ref = _reference(r, a, gamma, beta, eps=1e-6)
    assert out.shape == (batch, seq, d_model)
    assert jnp.allclose(out, ref, atol=1e-5, rtol=1e-5)

    print("KERNEL_OK")
</pallas_src>

<mosaic_0001>
module attributes {stable_mosaic.version = 11 : i64} {
  func.func @_add_layernorm_kernel(%arg0: i32, %arg1: memref<16x128xf32, #tpu.memory_space<vmem>>, %arg2: memref<16x128xf32, #tpu.memory_space<vmem>>, %arg3: memref<1x128xf32, #tpu.memory_space<vmem>>, %arg4: memref<1x128xf32, #tpu.memory_space<vmem>>, %arg5: memref<16x128xf32, #tpu.memory_space<vmem>>) attributes {dimension_semantics = [#tpu.dimension_semantics<parallel>], iteration_bounds = array<i64: 1>, scalar_prefetch = 0 : i64, scratch_operands = 0 : i64, tpu.core_type = #tpu.core_type<tc>, window_params = [{transform_indices = @transform_0, window_bounds = array<i64: 16, 128>}, {transform_indices = @transform_1, window_bounds = array<i64: 16, 128>}, {pipeline_mode = #tpu.pipeline_mode<synchronous>, transform_indices = @transform_2, window_bounds = array<i64: 1, 128>}, {pipeline_mode = #tpu.pipeline_mode<synchronous>, transform_indices = @transform_3, window_bounds = array<i64: 1, 128>}, {transform_indices = @transform_4, window_bounds = array<i64: 16, 128>}]} {
    %c0 = arith.constant 0 : index
    %c0_0 = arith.constant 0 : index
    %0 = vector.load %arg1[%c0, %c0_0] : memref<16x128xf32, #tpu.memory_space<vmem>>, vector<16x128xf32>
    %c0_1 = arith.constant 0 : index
    %c0_2 = arith.constant 0 : index
    %1 = vector.load %arg2[%c0_1, %c0_2] : memref<16x128xf32, #tpu.memory_space<vmem>>, vector<16x128xf32>
    %2 = arith.addf %0, %1 : vector<16x128xf32>
    %cst = arith.constant dense<0.000000e+00> : vector<16xf32>
    %3 = vector.multi_reduction <add>, %2, %cst [1] : vector<16x128xf32> to vector<16xf32>
    %4 = vector.shape_cast %3 : vector<16xf32> to vector<16x1xf32>
    %cst_3 = arith.constant 3.125000e-02 : f32
    %5 = vector.broadcast %cst_3 : f32 to vector<16x1xf32>
    %6 = arith.mulf %4, %5 : vector<16x1xf32>
    %7 = vector.broadcast %6 : vector<16x1xf32> to vector<16x128xf32>
    %8 = arith.subf %2, %7 : vector<16x128xf32>
    %9 = tpu.iota {dimensions = array<i32: 1>} : vector<16x128xi32>
    %c32_i32 = arith.constant 32 : i32
    %10 = vector.broadcast %c32_i32 : i32 to vector<16x128xi32>
    %11 = arith.cmpi slt, %9, %10 : vector<16x128xi32>
    %cst_4 = arith.constant 0.000000e+00 : f32
    %12 = vector.broadcast %cst_4 : f32 to vector<16x128xf32>
    %13 = arith.select %11, %8, %12 : vector<16x128xi1>, vector<16x128xf32>
    %14 = arith.mulf %13, %13 : vector<16x128xf32>
    %cst_5 = arith.constant dense<0.000000e+00> : vector<16xf32>
    %15 = vector.multi_reduction <add>, %14, %cst_5 [1] : vector<16x128xf32> to vector<16xf32>
    %16 = vector.shape_cast %15 : vector<16xf32> to vector<16x1xf32>
    %cst_6 = arith.constant 3.125000e-02 : f32
    %17 = vector.broadcast %cst_6 : f32 to vector<16x1xf32>
    %18 = arith.mulf %16, %17 : vector<16x1xf32>
    %cst_7 = arith.constant 9.99999997E-7 : f32
    %19 = vector.broadcast %cst_7 : f32 to vector<16x1xf32>
    %20 = arith.addf %18, %19 : vector<16x1xf32>
    %21 = math.rsqrt %20 : vector<16x1xf32>
    %22 = vector.broadcast %21 : vector<16x1xf32> to vector<16x128xf32>
    %23 = arith.mulf %13, %22 : vector<16x128xf32>
    %c0_8 = arith.constant 0 : index
    %c0_9 = arith.constant 0 : index
    %24 = vector.load %arg3[%c0_8, %c0_9] : memref<1x128xf32, #tpu.memory_space<vmem>>, vector<1x128xf32>
    %25 = vector.broadcast %24 : vector<1x128xf32> to vector<16x128xf32>
    %26 = arith.mulf %23, %25 : vector<16x128xf32>
    %c0_10 = arith.constant 0 : index
    %c0_11 = arith.constant 0 : index
    %27 = vector.load %arg4[%c0_10, %c0_11] : memref<1x128xf32, #tpu.memory_space<vmem>>, vector<1x128xf32>
    %28 = vector.broadcast %27 : vector<1x128xf32> to vector<16x128xf32>
    %29 = arith.addf %26, %28 : vector<16x128xf32>
    %c0_12 = arith.constant 0 : index
    %c0_13 = arith.constant 0 : index
    %30 = vector.load %arg5[%c0_12, %c0_13] : memref<16x128xf32, #tpu.memory_space<vmem>>, vector<16x128xf32>
    tpu.vector_store %arg5[%c0_12, %c0_13], %29 {strides = array<i32>} : memref<16x128xf32, #tpu.memory_space<vmem>>, vector<16x128xf32>,
    return
  }
  func.func @transform_0(%arg0: i32) -> (i32, i32) {
    %c0_i32 = arith.constant 0 : i32
    %c0_i32_0 = arith.constant 0 : i32
    return %arg0, %c0_i32 : i32, i32
  }
  func.func @transform_1(%arg0: i32) -> (i32, i32) {
    %c0_i32 = arith.constant 0 : i32
    %c0_i32_0 = arith.constant 0 : i32
    return %arg0, %c0_i32 : i32, i32
  }
  func.func @transform_2(%arg0: i32) -> (i32, i32) {
    %c0_i32 = arith.constant 0 : i32
    %c0_i32_0 = arith.constant 0 : i32
    %c0_i32_1 = arith.constant 0 : i32
    return %c0_i32, %c0_i32_0 : i32, i32
  }
  func.func @transform_3(%arg0: i32) -> (i32, i32) {
    %c0_i32 = arith.constant 0 : i32
    %c0_i32_0 = arith.constant 0 : i32
    %c0_i32_1 = arith.constant 0 : i32
    return %c0_i32, %c0_i32_0 : i32, i32
  }
  func.func @transform_4(%arg0: i32) -> (i32, i32) {
    %c0_i32 = arith.constant 0 : i32
    %c0_i32_0 = arith.constant 0 : i32
    return %arg0, %c0_i32 : i32, i32
  }
}

</mosaic_0001>

<llo_original>
// kernel: tpu_custom_call.1
$region0: #{tpu_custom_call.1}
  #allocation0 [shape = 'u32[]', space=smem, size = 0x4, offset = 0x4, fixed_abs, tag = 'smem constant byte address 0x4 - core index']
  #allocation1 [shape = 'u32[144,128]{1,0:T(1,128)}', space=vmem, size = 0x12000, scoped, tag = 'internal scratch']
  %s0 = inlined_call_operand.hbm [shape: f32[16,128], index: 0, kind: input, shape index: {}]
  %s1 = inlined_call_operand.hbm [shape: f32[16,128], index: 1, kind: input, shape index: {}]
  %s2 = inlined_call_operand.vmem [shape: f32[1,128], index: 2, kind: input, shape index: {}]
  %s3 = inlined_call_operand.vmem [shape: f32[1,128], index: 3, kind: input, shape index: {}]
  %s4 = inlined_call_operand.hbm [shape: f32[16,128], index: 4, kind: output, shape index: {}]
  %s5 = sld [smem:[#allocation0]]
  $region34: #{tpu_custom_call.1} parent=0
    _
  %s7 = ssub.s32 1, %s5
  %s8 = scalar_select 0, %s7, %s5
  $region1: #{tpu_custom_call.1} parent=0
    #allocation2 [shape = 'u8[8192]{0}', space=vmem, size = 0x2000, scoped, tag = 'input window, operand 0, single buffered']
    #allocation3 [shape = 's32[1]{0}', space=sflag, size = 0x4, scoped, tag = 'scoped memory for tpu_custom_call.1']
    #allocation4 [shape = 's32[1]{0}', space=sflag, size = 0x4, scoped, tag = 'scoped memory for tpu_custom_call.1']
    #allocation5 [shape = 'u8[8192]{0}', space=vmem, size = 0x2000, scoped, tag = 'input window, operand 1, single buffered']
    #allocation6 [shape = 's32[1]{0}', space=sflag, size = 0x4, scoped, tag = 'scoped memory for tpu_custom_call.1']
    #allocation7 [shape = 'u8[8192]{0}', space=vmem, size = 0x2000, scoped, tag = 'output window, operand 0, single buffered']
    %9 = vsyncpa [#allocation3], 0
    %10 = vsyncpa [#allocation6], 0
    %11 = vsyncpa [#allocation4], 0
    // Predicated region
    $region2: #{tpu_custom_call.1} parent=1 // pred_check
      _
    $region3: #{tpu_custom_call.1} parent=1 // pred_check_branch
      %13 = sbr.rel (0) target = $region5
    $region4: #{tpu_custom_call.1} parent=1 // pred_region
      %s15 = ssub.s32 256, 256
      %16 = vsyncadd [#allocation3], %s15
      %s17 = sshll.u32 [#allocation2], 4
      %s18 = int_to_ptr.vmem [resolvable:$true] %s17
      %23 = dma.hbm_to_vmem [thread:$0]  %s0, 256, %s18, [#allocation3], 128, 128, 8
    $region5: #{tpu_custom_call.1} parent=1 // pred_fallthru
      _
    // Predicated region
    $region6: #{tpu_custom_call.1} parent=1 // pred_check
      _
    $region7: #{tpu_custom_call.1} parent=1 // pred_check_branch
      %25 = sbr.rel (0) target = $region9
    $region8: #{tpu_custom_call.1} parent=1 // pred_region
      %s27 = ssub.s32 256, 256
      %28 = vsyncadd [#allocation6], %s27
      %s29 = sshll.u32 [#allocation5], 4
      %s30 = int_to_ptr.vmem [resolvable:$true] %s29
      %35 = dma.hbm_to_vmem [thread:$0]  %s1, 256, %s30, [#allocation6], 128, 128, 8
    $region9: #{tpu_custom_call.1} parent=1 // pred_fallthru
      _
    // Predicated region
    $region10: #{tpu_custom_call.1} parent=1 // pred_check
      _
    $region11: #{tpu_custom_call.1} parent=1 // pred_check_branch
      %37 = sbr.rel (0) target = $region13
    $region12: #{tpu_custom_call.1} parent=1 // pred_region
      _
    $region13: #{tpu_custom_call.1} parent=1 // pred_fallthru
      _
    // Predicated region
    $region14: #{tpu_custom_call.1} parent=1 // pred_check
      _
    $region15: #{tpu_custom_call.1} parent=1 // pred_check_branch
      %39 = sbr.rel (0) target = $region17
    $region16: #{tpu_custom_call.1} parent=1 // pred_region
      _
    $region17: #{tpu_custom_call.1} parent=1 // pred_fallthru
      _
    // Predicated region
    $region18: #{tpu_custom_call.1} parent=1 // pred_check
      _
    $region19: #{tpu_custom_call.1} parent=1 // pred_check_branch
      %41 = sbr.rel (0) target = $region21
    $region20: #{tpu_custom_call.1} parent=1 // pred_region
      %42 = dma.done [#allocation3], 256
    $region21: #{tpu_custom_call.1} parent=1 // pred_fallthru
      _
    // Predicated region
    $region22: #{tpu_custom_call.1} parent=1 // pred_check
      _
    $region23: #{tpu_custom_call.1} parent=1 // pred_check_branch
      %44 = sbr.rel (0) target = $region25
    $region24: #{tpu_custom_call.1} parent=1 // pred_region
      %45 = dma.done [#allocation6], 256
    $region25: #{tpu_custom_call.1} parent=1 // pred_fallthru
      _
    %v46 = vld [vmem:[#allocation2] sm:$0xff]
    %v47 = vld [vmem:[#allocation2 + $0x8] sm:$0xff]
    %v48 = vld [vmem:[#allocation5] sm:$0xff]
    %v49 = vld [vmem:[#allocation5 + $0x8] sm:$0xff]
    %v50 = vadd.f32 %v46, %v48
    %v51 = vadd.f32 %v47, %v49
    %52 = vadd.xlane.f32.xlu0 %v50
    %v53 = vpop.xlane.xlu0 %52
    %54 = vadd.xlane.f32.xlu0 %v51
    %v55 = vpop.xlane.xlu0 %54
    %v56 = vmul.f32 %v53, 0.03125
    %v57 = vmul.f32 %v55, 0.03125
    %v58 = vsub.f32 %v50, %v56
    %v59 = vsub.f32 %v51, %v57
    %v60 = vlaneseq
    %v61 = vand.u32 %v60, 127
    %vm62 = vcmp.lt.s32.totalorder %v61, 32
    %v63 = vsel %vm62, %v58, 0.0
    %v64 = vsel %vm62, %v59, 0.0
    %v65 = vmul.f32 %v63, %v63
    %v66 = vmul.f32 %v64, %v64
    %67 = vadd.xlane.f32.xlu0 %v65
    %v68 = vpop.xlane.xlu0 %67
    %69 = vadd.xlane.f32.xlu0 %v66
    %v70 = vpop.xlane.xlu0 %69
    %v71 = vmul.f32 %v68, 0.03125
    %v72 = vmul.f32 %v70, 0.03125
    %v73 = vadd.f32 %v71, 1e-06
    %v74 = vadd.f32 %v72, 1e-06
    %v75 = vrsqrt.pop %v73
    %v76 = vrsqrt.pop %v74
    %v77 = vmul.f32 %v63, %v75
    %v78 = vmul.f32 %v64, %v76
    %v79 = vld [vmem:[%s2] sm:$0x1]
    %v81 = vlaneseq
    %v82 = vshrl.u32 %v81, 7
    %v83 = vsub.s32 0, %v82
    %v84 = vrot.slane %v79, %v83
    %v86 = vmul.f32 %v77, %v84
    %v87 = vmul.f32 %v78, %v84
    %v88 = vld [vmem:[%s3] sm:$0x1]
    %v90 = vlaneseq
    %v91 = vshrl.u32 %v90, 7
    %v92 = vsub.s32 0, %v91
    %v93 = vrot.slane %v88, %v92
    %v95 = vadd.f32 %v86, %v93
    %v96 = vadd.f32 %v87, %v93
    %97 = vst [vmem:[#allocation7] sm:$0xff] %v95
    %98 = vst [vmem:[#allocation7 + $0x8] sm:$0xff] %v96
    // Predicated region
    $region26: #{tpu_custom_call.1} parent=1 // pred_check
      _
    $region27: #{tpu_custom_call.1} parent=1 // pred_check_branch
      %100 = sbr.rel (0) target = $region29
    $region28: #{tpu_custom_call.1} parent=1 // pred_region
      %s102 = ssub.s32 256, 256
      %103 = vsyncadd [#allocation4], %s102
      %s104 = sshll.u32 [#allocation7], 4
      %s105 = int_to_ptr.vmem [resolvable:$true] %s104
      %110 = dma.vmem_to_hbm [thread:$0]  %s105, 256, %s4, [#allocation4], 128, 128, 8
    $region29: #{tpu_custom_call.1} parent=1 // pred_fallthru
      _
    // Predicated region
    $region30: #{tpu_custom_call.1} parent=1 // pred_check
      _
    $region31: #{tpu_custom_call.1} parent=1 // pred_check_branch
      %112 = sbr.rel (0) target = $region33
    $region32: #{tpu_custom_call.1} parent=1 // pred_region
      %113 = dma.done [#allocation4], 256
    $region33: #{tpu_custom_call.1} parent=1 // pred_fallthru
      _
    %114 = vsyncpa [#allocation3], 1
    %115 = vsyncpa [#allocation6], 1
    %116 = vsyncpa [#allocation4], 1

</llo_original>
